<compile_context>
chip_gen: v6e
topology: v6e:2x2x1
jax: 0.10.0
libtpu: 0.0.40
codegen_flags: <defaults>
</compile_context>

<pallas_src>
import jax
import jax.numpy as jnp
from jax import lax
from jax.experimental import pallas as pl
from jax.experimental.pallas import tpu as pltpu


def linear_policy_kernel(x_ref, w_ref, b_ref, o_ref):
    """x_ref: [TM, obs] (bf16), w_ref: [act, obs] (bf16, PyTorch layout),
    b_ref: [1, act] (f32), o_ref: [TM, act]."""
    # Transpose-free contraction on the MXU: contract obs axis of x with obs axis
    # of the PyTorch-layout weight. Accumulate in f32.
    acc = lax.dot_general(
        x_ref[...],
        w_ref[...],
        dimension_numbers=(((1,), (1,)), ((), ())),
        preferred_element_type=jnp.float32,
    )
    o_ref[...] = (acc + b_ref[...]).astype(o_ref.dtype)


def linear_policy_forward(x, weight, bias, *, tm_max=512,
                          compute_dtype=jnp.bfloat16):
    """x: [B, obs], weight: [act, obs] (PyTorch convention), bias: [act].

    Returns y = x @ weight.T + bias with dtype of x.
    """
    B, obs_dim = x.shape
    act_dim, _ = weight.shape
    out_dtype = x.dtype

    # bf16 inputs halve HBM traffic on the memory-bound path; f32 accumulate in
    # the kernel preserves numerics to within input rounding. (In a real model,
    # store the params in compute_dtype once at init instead of casting here.)
    xc = x.astype(compute_dtype)
    wc = weight.astype(compute_dtype)              # stays in [act, obs]: no transpose
    b2 = bias.reshape(1, act_dim).astype(jnp.float32)

    # Row tile: full batch if small (block == full array dim is always legal),
    # else a large multiple-of-8 tile for pipelined DMA. Tail tiles are padded
    # by Pallas; rows are independent so padded math never touches real output.
    tm = B if B <= tm_max else tm_max
    grid = (pl.cdiv(B, tm),)

    return pl.pallas_call(
        linear_policy_kernel,
        out_shape=jax.ShapeDtypeStruct((B, act_dim), out_dtype),
        grid_spec=pltpu.PrefetchScalarGridSpec(
            num_scalar_prefetch=0,
            grid=grid,
            in_specs=[
                pl.BlockSpec((tm, obs_dim), lambda i: (i, 0)),       # batch tile
                pl.BlockSpec((act_dim, obs_dim), lambda i: (0, 0)),  # weight: resident
                pl.BlockSpec((1, act_dim), lambda i: (0, 0)),        # bias: resident
            ],
            out_specs=pl.BlockSpec((tm, act_dim), lambda i: (i, 0)),
        ),
        compiler_params=pltpu.CompilerParams(
            dimension_semantics=("parallel",),   # megacore split on v7x
        ),
    )(xc, wc, b2)


if __name__ == "__main__":
    # Small, deterministic setup consistent with LinearPolicy(obs_dim, act_dim).
    obs_dim, act_dim, batch = 32, 8, 4

    key = jax.random.PRNGKey(0)
    kx, kw, kb, kx2 = jax.random.split(key, 4)

    # PyTorch nn.Linear default init: U(-1/sqrt(in), 1/sqrt(in))
    bound = 1.0 / jnp.sqrt(jnp.float32(obs_dim))
    weight = jax.random.uniform(kw, (act_dim, obs_dim), jnp.float32, -bound, bound)
    bias = jax.random.uniform(kb, (act_dim,), jnp.float32, -bound, bound)
    x = jax.random.normal(kx, (batch, obs_dim), jnp.float32)

    y = linear_policy_forward(x, weight, bias)
    jax.block_until_ready(y)
    assert y.shape == (batch, act_dim)

    # Reference with the same bf16 input rounding + f32 accumulation.
    xb = x.astype(jnp.bfloat16).astype(jnp.float32)
    wb = weight.astype(jnp.bfloat16).astype(jnp.float32)
    y_ref = xb @ wb.T + bias
    assert jnp.allclose(y, y_ref, atol=1e-3, rtol=1e-3)

    # Sanity vs. pure-f32 PyTorch semantics (loose tol: bf16 input rounding).
    y_f32 = x @ weight.T + bias
    assert jnp.allclose(y, y_f32, atol=3e-2, rtol=3e-2)

    # Exercise the tiled/pipelined path: batch > TM with a ragged tail.
    batch2 = 1040
    x2 = jax.random.normal(kx2, (batch2, obs_dim), jnp.float32)
    y2 = linear_policy_forward(x2, weight, bias)
    jax.block_until_ready(y2)
    x2b = x2.astype(jnp.bfloat16).astype(jnp.float32)
    y2_ref = x2b @ wb.T + bias
    assert y2.shape == (batch2, act_dim)
    assert jnp.allclose(y2, y2_ref, atol=1e-3, rtol=1e-3)

    print("KERNEL_OK")
</pallas_src>

<mosaic_0001>
module attributes {stable_mosaic.version = 11 : i64} {
  func.func @linear_policy_kernel(%arg0: i32, %arg1: memref<4x32xbf16, #tpu.memory_space<vmem>>, %arg2: memref<8x32xbf16, #tpu.memory_space<vmem>>, %arg3: memref<1x8xf32, #tpu.memory_space<vmem>>, %arg4: memref<4x8xf32, #tpu.memory_space<vmem>>) attributes {dimension_semantics = [#tpu.dimension_semantics<parallel>], iteration_bounds = array<i64: 1>, scalar_prefetch = 0 : i64, scratch_operands = 0 : i64, tpu.core_type = #tpu.core_type<tc>, window_params = [{transform_indices = @transform_0, window_bounds = array<i64: 4, 32>}, {pipeline_mode = #tpu.pipeline_mode<synchronous>, transform_indices = @transform_1, window_bounds = array<i64: 8, 32>}, {pipeline_mode = #tpu.pipeline_mode<synchronous>, transform_indices = @transform_2, window_bounds = array<i64: 1, 8>}, {transform_indices = @transform_3, window_bounds = array<i64: 4, 8>}]} {
    %c0 = arith.constant 0 : index
    %c0_0 = arith.constant 0 : index
    %0 = vector.load %arg1[%c0, %c0_0] : memref<4x32xbf16, #tpu.memory_space<vmem>>, vector<4x32xbf16>
    %c0_1 = arith.constant 0 : index
    %c0_2 = arith.constant 0 : index
    %1 = vector.load %arg2[%c0_1, %c0_2] : memref<8x32xbf16, #tpu.memory_space<vmem>>, vector<8x32xbf16>
    %cst = arith.constant dense<0.000000e+00> : vector<4x8xf32>
    %2 = tpu.matmul %0, %1, %cst {dimension_numbers = #tpu.dot_dimension_numbers<[1], [1], [0], [0], [0, 0, 1, 0], [], []>} : vector<4x32xbf16>, vector<8x32xbf16>, vector<4x8xf32> -> vector<4x8xf32>
    %c0_3 = arith.constant 0 : index
    %c0_4 = arith.constant 0 : index
    %3 = vector.load %arg3[%c0_3, %c0_4] : memref<1x8xf32, #tpu.memory_space<vmem>>, vector<1x8xf32>
    %4 = vector.broadcast %3 : vector<1x8xf32> to vector<4x8xf32>
    %5 = arith.addf %2, %4 : vector<4x8xf32>
    %c0_5 = arith.constant 0 : index
    %c0_6 = arith.constant 0 : index
    %6 = vector.load %arg4[%c0_5, %c0_6] : memref<4x8xf32, #tpu.memory_space<vmem>>, vector<4x8xf32>
    tpu.vector_store %arg4[%c0_5, %c0_6], %5 {strides = array<i32>} : memref<4x8xf32, #tpu.memory_space<vmem>>, vector<4x8xf32>,
    return
  }
  func.func @transform_0(%arg0: i32) -> (i32, i32) {
    %c0_i32 = arith.constant 0 : i32
    %c0_i32_0 = arith.constant 0 : i32
    return %arg0, %c0_i32 : i32, i32
  }
  func.func @transform_1(%arg0: i32) -> (i32, i32) {
    %c0_i32 = arith.constant 0 : i32
    %c0_i32_0 = arith.constant 0 : i32
    %c0_i32_1 = arith.constant 0 : i32
    return %c0_i32, %c0_i32_0 : i32, i32
  }
  func.func @transform_2(%arg0: i32) -> (i32, i32) {
    %c0_i32 = arith.constant 0 : i32
    %c0_i32_0 = arith.constant 0 : i32
    %c0_i32_1 = arith.constant 0 : i32
    return %c0_i32, %c0_i32_0 : i32, i32
  }
  func.func @transform_3(%arg0: i32) -> (i32, i32) {
    %c0_i32 = arith.constant 0 : i32
    %c0_i32_0 = arith.constant 0 : i32
    return %arg0, %c0_i32 : i32, i32
  }
}

</mosaic_0001>

<llo_original>
// kernel: tpu_custom_call.1
$region0: #{tpu_custom_call.1}
  #allocation0 [shape = 'u32[]', space=smem, size = 0x4, offset = 0x4, fixed_abs, tag = 'smem constant byte address 0x4 - core index']
  #allocation1 [shape = 'u32[144,128]{1,0:T(1,128)}', space=vmem, size = 0x12000, scoped, tag = 'internal scratch']
  %s0 = inlined_call_operand.hbm [shape: bf16[4,32], index: 0, kind: input, shape index: {}]
  %s1 = inlined_call_operand.hbm [shape: bf16[8,32], index: 1, kind: input, shape index: {}]
  %s2 = inlined_call_operand.vmem [shape: f32[1,8], index: 2, kind: input, shape index: {}]
  %s3 = inlined_call_operand.hbm [shape: f32[4,8], index: 3, kind: output, shape index: {}]
  %s4 = sld [smem:[#allocation0]]
  $region30: #{tpu_custom_call.1} parent=0
    _
  %s6 = ssub.s32 1, %s4
  %s7 = scalar_select 0, %s6, %s4
  $region1: #{tpu_custom_call.1} parent=0
    #allocation2 [shape = 'u8[1024]{0}', space=vmem, size = 0x400, scoped, tag = 'input window, operand 0, single buffered']
    #allocation3 [shape = 's32[1]{0}', space=sflag, size = 0x4, scoped, tag = 'scoped memory for tpu_custom_call.1']
    #allocation4 [shape = 's32[1]{0}', space=sflag, size = 0x4, scoped, tag = 'scoped memory for tpu_custom_call.1']
    #allocation5 [shape = 'u8[2048]{0}', space=vmem, size = 0x800, scoped, tag = 'input window, operand 1, single buffered']
    #allocation6 [shape = 's32[1]{0}', space=sflag, size = 0x4, scoped, tag = 'scoped memory for tpu_custom_call.1']
    #allocation7 [shape = 'u8[2048]{0}', space=vmem, size = 0x800, scoped, tag = 'output window, operand 0, single buffered']
    %8 = vsyncpa [#allocation3], 0
    %9 = vsyncpa [#allocation6], 0
    %10 = vsyncpa [#allocation4], 0
    // Predicated region
    $region2: #{tpu_custom_call.1} parent=1 // pred_check
      _
    $region3: #{tpu_custom_call.1} parent=1 // pred_check_branch
      %12 = sbr.rel (0) target = $region5
    $region4: #{tpu_custom_call.1} parent=1 // pred_region
      %s14 = ssub.s32 32, 32
      %15 = vsyncadd [#allocation3], %s14
      %s17 = sshll.u32 [#allocation2], 4
      %s18 = int_to_ptr.vmem [resolvable:$true] %s17
      %20 = dma.hbm_to_vmem [thread:$0]  %s0, 32, %s18, [#allocation3]
    $region5: #{tpu_custom_call.1} parent=1 // pred_fallthru
      _
    // Predicated region
    $region6: #{tpu_custom_call.1} parent=1 // pred_check
      _
    $region7: #{tpu_custom_call.1} parent=1 // pred_check_branch
      %22 = sbr.rel (0) target = $region9
    $region8: #{tpu_custom_call.1} parent=1 // pred_region
      %s24 = ssub.s32 64, 64
      %25 = vsyncadd [#allocation6], %s24
      %s27 = sshll.u32 [#allocation5], 4
      %s28 = int_to_ptr.vmem [resolvable:$true] %s27
      %30 = dma.hbm_to_vmem [thread:$0]  %s1, 64, %s28, [#allocation6]
    $region9: #{tpu_custom_call.1} parent=1 // pred_fallthru
      _
    // Predicated region
    $region10: #{tpu_custom_call.1} parent=1 // pred_check
      _
    $region11: #{tpu_custom_call.1} parent=1 // pred_check_branch
      %32 = sbr.rel (0) target = $region13
    $region12: #{tpu_custom_call.1} parent=1 // pred_region
      _
    $region13: #{tpu_custom_call.1} parent=1 // pred_fallthru
      _
    // Predicated region
    $region14: #{tpu_custom_call.1} parent=1 // pred_check
      _
    $region15: #{tpu_custom_call.1} parent=1 // pred_check_branch
      %34 = sbr.rel (0) target = $region17
    $region16: #{tpu_custom_call.1} parent=1 // pred_region
      %35 = dma.done [#allocation3], 32
    $region17: #{tpu_custom_call.1} parent=1 // pred_fallthru
      _
    // Predicated region
    $region18: #{tpu_custom_call.1} parent=1 // pred_check
      _
    $region19: #{tpu_custom_call.1} parent=1 // pred_check_branch
      %37 = sbr.rel (0) target = $region21
    $region20: #{tpu_custom_call.1} parent=1 // pred_region
      %38 = dma.done [#allocation6], 64
    $region21: #{tpu_custom_call.1} parent=1 // pred_fallthru
      _
    %v40 = vld [vmem:[#allocation2] sm:$0x3]
    %v41 = vld [vmem:[#allocation5] sm:$0xf]
    %v42 = vld [vmem:[%s2] sm:$0x1]
    %v44 = vlaneseq
    %v45 = vshrl.u32 %v44, 7
    %v46 = vsub.s32 0, %v45
    %v47 = vrot.slane %v42, %v46
    %vm49 = vcmask 261120
    %v51 = vsel %vm49, %v40, 0
    %v54 = vsel %vm49, %v41, 0
    %56 = vmatprep.subr.bf16.mxu0 0
    %57 = vmatpush1.bf16.xpose.msra.mxu0 0
    %58 = vmatprep.subr.bf16.mxu0 0
    %59 = vmatpush1.bf16.xpose.msra.mxu0 0
    %60 = vmatprep.subr.bf16.mxu0 0
    %61 = vmatpush1.bf16.xpose.msra.mxu0 0
    %62 = vmatprep.subr.bf16.mxu0 0
    %63 = vmatpush1.bf16.xpose.msra.mxu0 0
    %64 = vmatprep.subr.bf16.mxu0 0
    %65 = vmatpush1.bf16.xpose.msra.mxu0 0
    %66 = vmatprep.subr.bf16.mxu0 0
    %67 = vmatpush1.bf16.xpose.msra.mxu0 0
    %68 = vmatprep.subr.bf16.mxu0 0
    %69 = vmatpush1.bf16.xpose.msra.mxu0 0
    %70 = vmatprep.subr.bf16.mxu0 0
    %71 = vmatpush1.bf16.xpose.msra.mxu0 %v54
    %72 = vmatprep.subr.bf16.mxu0 0
    %73 = vmatpush2.bf16.xpose.msra.mxu0 0
    %74 = vmatprep.subr.bf16.mxu0 0
    %75 = vmatpush2.bf16.xpose.msra.mxu0 0
    %76 = vmatprep.subr.bf16.mxu0 0
    %77 = vmatpush2.bf16.xpose.msra.mxu0 0
    %78 = vmatprep.subr.bf16.mxu0 0
    %79 = vmatpush2.bf16.xpose.msra.mxu0 0
    %80 = vmatprep.subr.bf16.mxu0 0
    %81 = vmatpush2.bf16.xpose.msra.mxu0 0
    %82 = vmatprep.subr.bf16.mxu0 0
    %83 = vmatpush2.bf16.xpose.msra.mxu0 0
    %84 = vmatprep.subr.bf16.mxu0 0
    %85 = vmatpush2.bf16.xpose.msra.mxu0 0
    %86 = vmatprep.subr.bf16.mxu0 0
    %87 = vmatpush2.bf16.xpose.msra.mxu0 0
    %88 = vmatprep.mubr.bf16.mxu0 0
    %89 = vmatmul.mubr.bf16.gmra.mxu0 %v51
    %v90 = vpop.f32.mrf.mxu0
    %v91 = vadd.f32 %v47, %v90
    %v92 = vpop.f32.mrf.mxu0
    %v93 = vpop.f32.mrf.mxu0
    %v94 = vpop.f32.mrf.mxu0
    %95 = vdwg.mxu0
    %vm96 = vcmask 60416
    %97 = vst.msk [vmem:[#allocation7] sm:$0xf] %vm96, %v91
    // Predicated region
    $region22: #{tpu_custom_call.1} parent=1 // pred_check
      _
    $region23: #{tpu_custom_call.1} parent=1 // pred_check_branch
      %99 = sbr.rel (0) target = $region25
    $region24: #{tpu_custom_call.1} parent=1 // pred_region
      %s101 = ssub.s32 64, 64
      %102 = vsyncadd [#allocation4], %s101
      %s104 = sshll.u32 [#allocation7], 4
      %s105 = int_to_ptr.vmem [resolvable:$true] %s104
      %107 = dma.vmem_to_hbm [thread:$0]  %s105, 64, %s3, [#allocation4]
    $region25: #{tpu_custom_call.1} parent=1 // pred_fallthru
      _
    // Predicated region
    $region26: #{tpu_custom_call.1} parent=1 // pred_check
      _
    $region27: #{tpu_custom_call.1} parent=1 // pred_check_branch
      %109 = sbr.rel (0) target = $region29
    $region28: #{tpu_custom_call.1} parent=1 // pred_region
      %110 = dma.done [#allocation4], 64
    $region29: #{tpu_custom_call.1} parent=1 // pred_fallthru
      _
    %111 = vsyncpa [#allocation3], 1
    %112 = vsyncpa [#allocation6], 1
    %113 = vsyncpa [#allocation4], 1

</llo_original>
